<compile_context>
chip_gen: v7x
topology: tpu7x:2x2x1
jax: 0.10.0
libtpu: 0.0.40
codegen_flags: <defaults>
</compile_context>

<pallas_src>
import functools

import jax
import jax.numpy as jnp
import numpy as np
from jax.experimental import pallas as pl
from jax.experimental.pallas import tpu as pltpu


def _gnorm_kernel(x_ref, aff_ref, o_ref, *, eps, inv_n):
    # x_ref:   (gt, cpg, hw)  gt packed normalization groups
    # aff_ref: (gt, cpg, 2)   [:, :, 0] = gamma*w_out,  [:, :, 1] = beta*w_out + b_out
    x = x_ref[...].astype(jnp.float32)                                 # (gt, cpg, hw)

    # One-pass statistics per group: s1 = sum(x), s2 = sum(x*x).
    s1 = jnp.sum(jnp.sum(x, axis=-1, keepdims=True), axis=-2, keepdims=True)
    s2 = jnp.sum(jnp.sum(x * x, axis=-1, keepdims=True), axis=-2, keepdims=True)
    mu = s1 * inv_n                                                    # (gt, 1, 1)
    var = jnp.maximum(s2 * inv_n - mu * mu, 0.0)                       # biased var
    inv = jax.lax.rsqrt(var + eps)                                     # (gt, 1, 1)

    # Fold (x - mu) * inv * scale + offset into a single per-channel affine:
    #   a  = inv * scale
    #   b2 = offset - mu * a
    aff = aff_ref[...]                                                 # (gt, cpg, 2) f32
    a = inv * aff[:, :, 0:1]                                           # (gt, cpg, 1)
    b2 = aff[:, :, 1:2] - mu * a                                       # (gt, cpg, 1)

    o_ref[...] = (x * a + b2).astype(o_ref.dtype)                      # 2 VALU ops/elem


def gnorm_forward(x, gn_weight, gn_bias, weight, bias, num_in, groups, eps=1e-5):
    """Pallas implementation of gnorm.forward.

    PyTorch semantics:
        b, c, h, w = x.shape
        y = GroupNorm(groups, num_in)(x.view(b, num_in, c//num_in, h, w))
        y = y * weight + bias            # weight/bias shape (1, num_in, 1, 1, 1)
        return y.view(b, c, h, w)
    """
    b, c, h, w = x.shape
    assert c % num_in == 0 and num_in % groups == 0
    k = c // num_in                      # sub-channel dim introduced by the view
    hw = h * w
    cpg = c // groups                    # original channels per GroupNorm group
    bg = b * groups

    # Fold all affine terms into per-original-channel scale/offset (glue math).
    gamma = jnp.repeat(gn_weight.reshape(num_in), k)           # (c,)
    beta = jnp.repeat(gn_bias.reshape(num_in), k)              # (c,)
    w_out = jnp.repeat(weight.reshape(num_in), k)              # (c,)
    b_out = jnp.repeat(bias.reshape(num_in), k)                # (c,)
    scale = (gamma * w_out).astype(jnp.float32).reshape(groups, cpg)
    offset = (beta * w_out + b_out).astype(jnp.float32).reshape(groups, cpg)
    # Merge into one small array -> one DMA per grid step instead of two.
    aff = jnp.stack([scale, offset], axis=-1)                  # (groups, cpg, 2)
    aff = jnp.broadcast_to(aff[None], (b, groups, cpg, 2)).reshape(bg, cpg, 2)

    # Group-contiguous layout: one row per (batch, group).
    xr = x.reshape(bg, cpg, hw)

    # Pack multiple groups per grid step to reach ~2 MiB blocks, but keep at
    # least 2 grid steps (v7x has 2 TensorCores to shard the parallel axis).
    elem = x.dtype.itemsize
    group_bytes = cpg * hw * elem
    target_bytes = 2 * 1024 * 1024
    gt_max = max(1, target_bytes // group_bytes)
    gt_cap = max(1, bg // 2) if bg >= 2 else 1
    limit = min(gt_max, gt_cap)
    gt = 1
    for d in range(1, bg + 1):
        if bg % d == 0 and d <= limit:
            gt = d
    grid = (bg // gt,)

    # Explicit VMEM budget: double-buffered in/out blocks + f32 working set.
    # TODO(synk): for a single group whose cpg*hw block exceeds ~8 MiB, split hw
    # into an "arbitrary" grid axis with a two-pass accumulate/normalize scheme.
    blk_io = gt * group_bytes
    blk_f32 = gt * cpg * hw * 4
    vmem_limit = int(min(56 * 1024 * 1024,
                         max(24 * 1024 * 1024,
                             4 * blk_io + 4 * blk_f32 + (2 << 20))))

    kernel = functools.partial(_gnorm_kernel, eps=float(eps),
                               inv_n=1.0 / float(cpg * hw))

    out = pl.pallas_call(
        kernel,
        out_shape=jax.ShapeDtypeStruct((bg, cpg, hw), x.dtype),
        grid=grid,
        in_specs=[
            pl.BlockSpec((gt, cpg, hw), lambda i: (i, 0, 0)),
            pl.BlockSpec((gt, cpg, 2), lambda i: (i, 0, 0)),
        ],
        out_specs=pl.BlockSpec((gt, cpg, hw), lambda i: (i, 0, 0)),
        compiler_params=pltpu.CompilerParams(
            dimension_semantics=("parallel",),
            vmem_limit_bytes=vmem_limit),
    )(xr, aff)

    return out.reshape(b, c, h, w)


def _gnorm_reference(x, gn_weight, gn_bias, weight, bias, num_in, groups, eps=1e-5):
    # Pure-JAX reference mirroring the PyTorch module exactly.
    b, c, h, w = x.shape
    k = c // num_in
    x5 = x.reshape(b, num_in, k, h, w).astype(jnp.float32)
    xg = x5.reshape(b, groups, num_in // groups, k, h, w)
    mu = jnp.mean(xg, axis=(2, 3, 4, 5), keepdims=True)
    var = jnp.mean(jnp.square(xg - mu), axis=(2, 3, 4, 5), keepdims=True)
    xn = ((xg - mu) / jnp.sqrt(var + eps)).reshape(b, num_in, k, h, w)
    xn = xn * gn_weight.reshape(1, num_in, 1, 1, 1) + gn_bias.reshape(1, num_in, 1, 1, 1)
    y = xn * weight.reshape(1, num_in, 1, 1, 1) + bias.reshape(1, num_in, 1, 1, 1)
    return y.reshape(b, c, h, w).astype(x.dtype)


if __name__ == "__main__":
    key = jax.random.PRNGKey(0)
    kx, kg, kb, kw, kbi = jax.random.split(key, 5)

    # gnorm(in_type=(?, num_in), groups): num_in channels in the 5-D view.
    num_in = 8
    groups = 2
    b, c, h, w = 2, 16, 16, 16          # c must be a multiple of num_in

    x = jax.random.normal(kx, (b, c, h, w), dtype=jnp.float32)

    # Non-trivial (but deterministic) parameter values to exercise the fused affine.
    gn_weight = 1.0 + 0.1 * jax.random.normal(kg, (num_in,), dtype=jnp.float32)
    gn_bias = 0.1 * jax.random.normal(kb, (num_in,), dtype=jnp.float32)
    weight = 1.0 + 0.1 * jax.random.normal(kw, (1, num_in, 1, 1, 1), dtype=jnp.float32)
    bias = 0.1 * jax.random.normal(kbi, (1, num_in, 1, 1, 1), dtype=jnp.float32)

    out = gnorm_forward(x, gn_weight, gn_bias, weight, bias, num_in, groups)
    out = jax.block_until_ready(out)

    ref = _gnorm_reference(x, gn_weight, gn_bias, weight, bias, num_in, groups)
    np.testing.assert_allclose(np.asarray(out), np.asarray(ref), rtol=1e-5, atol=1e-5)

    print("KERNEL_OK")
</pallas_src>

<mosaic_0001>
module attributes {stable_mosaic.version = 11 : i64} {
  func.func @_gnorm_kernel(%arg0: i32, %arg1: memref<2x8x256xf32, #tpu.memory_space<vmem>>, %arg2: memref<2x8x2xf32, #tpu.memory_space<vmem>>, %arg3: memref<2x8x256xf32, #tpu.memory_space<vmem>>) attributes {dimension_semantics = [#tpu.dimension_semantics<parallel>], iteration_bounds = array<i64: 2>, scalar_prefetch = 0 : i64, scratch_operands = 0 : i64, tpu.core_type = #tpu.core_type<tc>, window_params = [{transform_indices = @transform_0, window_bounds = array<i64: 2, 8, 256>}, {transform_indices = @transform_1, window_bounds = array<i64: 2, 8, 2>}, {transform_indices = @transform_2, window_bounds = array<i64: 2, 8, 256>}]} {
    %c0 = arith.constant 0 : index
    %c0_0 = arith.constant 0 : index
    %c0_1 = arith.constant 0 : index
    %0 = vector.load %arg1[%c0, %c0_0, %c0_1] : memref<2x8x256xf32, #tpu.memory_space<vmem>>, vector<2x8x256xf32>
    %cst = arith.constant dense<0.000000e+00> : vector<2x8xf32>
    %1 = vector.multi_reduction <add>, %0, %cst [2] : vector<2x8x256xf32> to vector<2x8xf32>
    %2 = vector.shape_cast %1 : vector<2x8xf32> to vector<2x8x1xf32>
    %cst_2 = arith.constant dense<0.000000e+00> : vector<2x1xf32>
    %3 = vector.multi_reduction <add>, %2, %cst_2 [1] : vector<2x8x1xf32> to vector<2x1xf32>
    %4 = vector.shape_cast %3 : vector<2x1xf32> to vector<2x1x1xf32>
    %5 = arith.mulf %0, %0 : vector<2x8x256xf32>
    %cst_3 = arith.constant dense<0.000000e+00> : vector<2x8xf32>
    %6 = vector.multi_reduction <add>, %5, %cst_3 [2] : vector<2x8x256xf32> to vector<2x8xf32>
    %7 = vector.shape_cast %6 : vector<2x8xf32> to vector<2x8x1xf32>
    %cst_4 = arith.constant dense<0.000000e+00> : vector<2x1xf32>
    %8 = vector.multi_reduction <add>, %7, %cst_4 [1] : vector<2x8x1xf32> to vector<2x1xf32>
    %9 = vector.shape_cast %8 : vector<2x1xf32> to vector<2x1x1xf32>
    %cst_5 = arith.constant 4.8828125E-4 : f32
    %10 = vector.broadcast %cst_5 : f32 to vector<2x1x1xf32>
    %11 = arith.mulf %4, %10 : vector<2x1x1xf32>
    %cst_6 = arith.constant 4.8828125E-4 : f32
    %12 = vector.broadcast %cst_6 : f32 to vector<2x1x1xf32>
    %13 = arith.mulf %9, %12 : vector<2x1x1xf32>
    %14 = arith.mulf %11, %11 : vector<2x1x1xf32>
    %15 = arith.subf %13, %14 : vector<2x1x1xf32>
    %cst_7 = arith.constant 0.000000e+00 : f32
    %16 = vector.broadcast %cst_7 : f32 to vector<2x1x1xf32>
    %17 = arith.maximumf %15, %16 : vector<2x1x1xf32>
    %cst_8 = arith.constant 9.99999974E-6 : f32
    %18 = vector.broadcast %cst_8 : f32 to vector<2x1x1xf32>
    %19 = arith.addf %17, %18 : vector<2x1x1xf32>
    %20 = math.rsqrt %19 : vector<2x1x1xf32>
    %c0_9 = arith.constant 0 : index
    %c0_10 = arith.constant 0 : index
    %c0_11 = arith.constant 0 : index
    %21 = vector.load %arg2[%c0_9, %c0_10, %c0_11] : memref<2x8x2xf32, #tpu.memory_space<vmem>>, vector<2x8x2xf32>
    %22 = vector.extract_strided_slice %21 {offsets = [0, 0, 0], sizes = [2, 8, 1], strides = [1, 1, 1]} : vector<2x8x2xf32> to vector<2x8x1xf32>
    %23 = vector.broadcast %20 : vector<2x1x1xf32> to vector<2x8x1xf32>
    %24 = arith.mulf %23, %22 : vector<2x8x1xf32>
    %25 = vector.extract_strided_slice %21 {offsets = [0, 0, 1], sizes = [2, 8, 1], strides = [1, 1, 1]} : vector<2x8x2xf32> to vector<2x8x1xf32>
    %26 = vector.broadcast %11 : vector<2x1x1xf32> to vector<2x8x1xf32>
    %27 = arith.mulf %26, %24 : vector<2x8x1xf32>
    %28 = arith.subf %25, %27 : vector<2x8x1xf32>
    %29 = vector.broadcast %24 : vector<2x8x1xf32> to vector<2x8x256xf32>
    %30 = arith.mulf %0, %29 : vector<2x8x256xf32>
    %31 = vector.broadcast %28 : vector<2x8x1xf32> to vector<2x8x256xf32>
    %32 = arith.addf %30, %31 : vector<2x8x256xf32>
    %c0_12 = arith.constant 0 : index
    %c0_13 = arith.constant 0 : index
    %c0_14 = arith.constant 0 : index
    %33 = vector.load %arg3[%c0_12, %c0_13, %c0_14] : memref<2x8x256xf32, #tpu.memory_space<vmem>>, vector<2x8x256xf32>
    tpu.vector_store %arg3[%c0_12, %c0_13, %c0_14], %32 {strides = array<i32>} : memref<2x8x256xf32, #tpu.memory_space<vmem>>, vector<2x8x256xf32>,
    return
  }
  func.func @transform_0(%arg0: i32) -> (i32, i32, i32) {
    %c0_i32 = arith.constant 0 : i32
    %c0_i32_0 = arith.constant 0 : i32
    %c0_i32_1 = arith.constant 0 : i32
    return %arg0, %c0_i32, %c0_i32_0 : i32, i32, i32
  }
  func.func @transform_1(%arg0: i32) -> (i32, i32, i32) {
    %c0_i32 = arith.constant 0 : i32
    %c0_i32_0 = arith.constant 0 : i32
    %c0_i32_1 = arith.constant 0 : i32
    return %arg0, %c0_i32, %c0_i32_0 : i32, i32, i32
  }
  func.func @transform_2(%arg0: i32) -> (i32, i32, i32) {
    %c0_i32 = arith.constant 0 : i32
    %c0_i32_0 = arith.constant 0 : i32
    %c0_i32_1 = arith.constant 0 : i32
    return %arg0, %c0_i32, %c0_i32_0 : i32, i32, i32
  }
}

</mosaic_0001>

<llo_original>
// kernel: tpu_custom_call.1
$region0: #{tpu_custom_call.1}
  #allocation0 [shape = 'u32[]', space=smem, size = 0x4, offset = 0x4, fixed_abs, tag = 'smem constant byte address 0x4 - core index']
  #allocation1 [shape = 'u32[144,128]{1,0:T(1,128)}', space=vmem, size = 0x12000, scoped, tag = 'internal scratch']
  %s0 = inlined_call_operand.hbm [shape: f32[4,8,256], index: 0, kind: input, shape index: {}]
  %s1 = inlined_call_operand.vmem [shape: f32[4,8,2], index: 1, kind: input, shape index: {}]
  %s2 = inlined_call_operand.hbm [shape: f32[4,8,256], index: 2, kind: output, shape index: {}]
  %s3 = sld [smem:[#allocation0]]
  $region45: #{tpu_custom_call.1} parent=0
    _
  %s5 = ssub.s32 1, %s3
  %s6 = scalar_select 0, %s5, %s3
  $region1: #{tpu_custom_call.1} parent=0
    #allocation2 [shape = 'u8[32768]{0}', space=vmem, size = 0x8000, scoped, tag = 'input window, operand 0']
    #allocation3 [shape = 's32[2]{0}', space=sflag, size = 0x8, scoped, tag = 'scoped memory for tpu_custom_call.1']
    #allocation4 [shape = 's32[2]{0}', space=sflag, size = 0x8, scoped, tag = 'scoped memory for tpu_custom_call.1']
    #allocation5 [shape = 'u8[32768]{0}', space=vmem, size = 0x8000, scoped, tag = 'output window, operand 0']
    %7 = vsyncpa [#allocation3], 0
    %s8 = scalar_lea.sflag [#allocation3], 1
    %9 = vsyncpa %s8, 0
    %10 = vsyncpa [#allocation4], 0
    %s11 = scalar_lea.sflag [#allocation4], 1
    %12 = vsyncpa %s11, 0
    loop: start=0, step=1, limit=4
    $region2: #{tpu_custom_call.1} parent=1 // loop_pre_header
      _
    $region3: #{tpu_custom_call.1} parent=1 // loop_header
      %s14 = sphi 0, %s18
      %p15 = scmp.ge.s32.totalorder %s14, 4
      %s24 = sphi 0, %s26
      %s27 = sphi 0, %s24
      %s28 = sphi 0, %s27
      %s44 = sphi 0, %s28
      %s50 = sphi 0, %s52
      %s53 = sphi 0, %s50
      %s54 = sphi 0, %s53
      %s70 = sphi 0, %s54
      %s76 = sphi 0, %s78
      %s79 = sphi 0, %s76
      %s80 = sphi 0, %s79
      %s96 = sphi 0, %s80
    $region4: #{tpu_custom_call.1} parent=1 // loop_header_branch
      %17 = sbr.rel (%p15) target = $region8
    $region5: #{tpu_custom_call.1} parent=1 // loop_body
      %s19 = ssub.s32 %s14, 1
      %s20 = ssub.s32 %s14, 2
      %s21 = sadd.s32 %s14, 1
      %s22 = ssub.s32 %s14, %s21
      %p23 = scmp.eq.s32.totalorder %s22, 0
      %s25 = sadd.s32 %s24, 1
      %s26 = scalar_select %p23, %s24, %s25
      %p29 = pneg %p23
      %p30 = scmp.eq.s32.totalorder %s14, 1
      %p31 = por %p29, %p30
      %p32 = scmp.ne.s32.totalorder %s24, %s27
      %p33 = scmp.eq.s32.totalorder %s14, 0
      %p34 = por %p32, %p33
      %p35 = scmp.ne.s32.totalorder %s24, %s27
      %p36 = scmp.eq.s32.totalorder %s19, 1
      %p37 = por %p35, %p36
      %p38 = scmp.ne.s32.totalorder %s27, %s28
      %p39 = scmp.eq.s32.totalorder %s19, 0
      %p40 = por %p38, %p39
      %p41 = scmp.ne.s32.totalorder %s27, %s28
      %p42 = scmp.eq.s32.totalorder %s20, 1
      %p43 = por %p41, %p42
      %p45 = scmp.ne.s32.totalorder %s28, %s44
      %p46 = scmp.eq.s32.totalorder %s20, 0
      %p47 = por %p45, %p46
      %s48 = ssub.s32 %s14, %s21
      %p49 = scmp.eq.s32.totalorder %s48, 0
      %s51 = sadd.s32 %s50, 1
      %s52 = scalar_select %p49, %s50, %s51
      %p55 = pneg %p49
      %p56 = scmp.eq.s32.totalorder %s14, 1
      %p57 = por %p55, %p56
      %p58 = scmp.ne.s32.totalorder %s50, %s53
      %p59 = scmp.eq.s32.totalorder %s14, 0
      %p60 = por %p58, %p59
      %p61 = scmp.ne.s32.totalorder %s50, %s53
      %p62 = scmp.eq.s32.totalorder %s19, 1
      %p63 = por %p61, %p62
      %p64 = scmp.ne.s32.totalorder %s53, %s54
      %p65 = scmp.eq.s32.totalorder %s19, 0
      %p66 = por %p64, %p65
      %p67 = scmp.ne.s32.totalorder %s53, %s54
      %p68 = scmp.eq.s32.totalorder %s20, 1
      %p69 = por %p67, %p68
      %p71 = scmp.ne.s32.totalorder %s54, %s70
      %p72 = scmp.eq.s32.totalorder %s20, 0
      %p73 = por %p71, %p72
      %s74 = ssub.s32 %s14, %s21
      %p75 = scmp.eq.s32.totalorder %s74, 0
      %s77 = sadd.s32 %s76, 1
      %s78 = scalar_select %p75, %s76, %s77
      %p81 = pneg %p75
      %p82 = scmp.eq.s32.totalorder %s14, 1
      %p83 = por %p81, %p82
      %p84 = scmp.ne.s32.totalorder %s76, %s79
      %p85 = scmp.eq.s32.totalorder %s14, 0
      %p86 = por %p84, %p85
      %p87 = scmp.ne.s32.totalorder %s76, %s79
      %p88 = scmp.eq.s32.totalorder %s19, 1
      %p89 = por %p87, %p88
      %p90 = scmp.ne.s32.totalorder %s79, %s80
      %p91 = scmp.eq.s32.totalorder %s19, 0
      %p92 = por %p90, %p91
      %p93 = scmp.ne.s32.totalorder %s79, %s80
      %p94 = scmp.eq.s32.totalorder %s20, 1
      %p95 = por %p93, %p94
      %p97 = scmp.ne.s32.totalorder %s80, %s96
      %p98 = scmp.eq.s32.totalorder %s20, 0
      %p99 = por %p97, %p98
      %p100 = scmp.le.s32.totalorder 1, %s14
      %p101 = scmp.lt.s32.totalorder %s14, 3
      %p102 = pnand %p100, %p101
      %p103 = pneg %p102
      // Predicated region
      $region9: #{tpu_custom_call.1} parent=5 // pred_check
        _
      $region10: #{tpu_custom_call.1} parent=5 // pred_check_branch
        %105 = sbr.rel (%p102) target = $region12
      $region11: #{tpu_custom_call.1} parent=5 // pred_region
        %s106 = ssub.s32 %s14, 1
      $region12: #{tpu_custom_call.1} parent=5 // pred_fallthru
        _
      %p107 = scmp.lt.s32.totalorder %s14, 2
      // Predicated region
      $region13: #{tpu_custom_call.1} parent=5 // pred_check
        %p108 = pneg %p107
      $region14: #{tpu_custom_call.1} parent=5 // pred_check_branch
        %110 = sbr.rel (%p108) target = $region16
      $region15: #{tpu_custom_call.1} parent=5 // pred_region
        // Predicated region
        $region17: #{tpu_custom_call.1} parent=15 // pred_check
          %p111 = pneg %p34
        $region18: #{tpu_custom_call.1} parent=15 // pred_check_branch
          %113 = sbr.rel (%p111) target = $region20
        $region19: #{tpu_custom_call.1} parent=15 // pred_region
          %s114 = sand.u32 %s24, 1
          %s115 = scalar_lea.sflag [#allocation3], %s114
          %s116 = sand.u32 %s24, 1
          %s117 = smul.addr %s116, 32
          %s118 = scalar_lea.vmem [#allocation2], %s117
          %s119 = smul.u32 2, %s14
          %s121 = ssub.s32 512, 512
          %122 = vsyncadd %s115, %s121
          %s123 = smul.addr %s119, 2
          %s124 = smul.addr %s123, 128
          %s125 = scalar_lea.hbm %s0, %s124
          %s126 = sshll.u32 %s118, 4
          %s127 = int_to_ptr.vmem [resolvable:$true] %s126
          %132 = dma.hbm_to_vmem [thread:$0]  %s125, 512, %s127, %s115, 256, 256, 16
        $region20: #{tpu_custom_call.1} parent=15 // pred_fallthru
          _
        // Predicated region
        $region21: #{tpu_custom_call.1} parent=15 // pred_check
          %p133 = pneg %p60
        $region22: #{tpu_custom_call.1} parent=15 // pred_check_branch
          %135 = sbr.rel (%p133) target = $region24
        $region23: #{tpu_custom_call.1} parent=15 // pred_region
          %s136 = smul.u32 2, %s14
          %p137 = scmp.lt.s32.totalorder %s136, 3
          %s138 = scalar_select %p137, %s136, 3
          %s139 = smul.addr %s138, 8
          %s140 = scalar_lea.vmem %s1, %s139
          %s141 = smul.u32 2, %s14
        $region24: #{tpu_custom_call.1} parent=15 // pred_fallthru
          _
      $region16: #{tpu_custom_call.1} parent=5 // pred_fallthru
        _
      %p142 = scmp.le.s32.totalorder 1, %s14
      %p143 = scmp.lt.s32.totalorder %s14, 3
      %p144 = pnand %p142, %p143
      %p145 = pneg %p144
      // Predicated region
      $region25: #{tpu_custom_call.1} parent=5 // pred_check
        _
      $region26: #{tpu_custom_call.1} parent=5 // pred_check_branch
        %147 = sbr.rel (%p144) target = $region28
      $region27: #{tpu_custom_call.1} parent=5 // pred_region
        %s148 = ssub.s32 %s14, 1
        %s149 = sand.u32 %s27, 1
        %s150 = scalar_lea.sflag [#allocation3], %s149
        %s151 = sand.u32 %s27, 1
        %s152 = smul.addr %s151, 32
        %s153 = scalar_lea.vmem [#allocation2], %s152
        // Predicated region
        $region29: #{tpu_custom_call.1} parent=27 // pred_check
          %p154 = pneg %p40
        $region30: #{tpu_custom_call.1} parent=27 // pred_check_branch
          %156 = sbr.rel (%p154) target = $region32
        $region31: #{tpu_custom_call.1} parent=27 // pred_region
          %157 = dma.done %s150, 512
        $region32: #{tpu_custom_call.1} parent=27 // pred_fallthru
          _
        %s158 = sand.u32 %s27, 1
        %s159 = scalar_lea.sflag [#allocation3], %s158
        %s160 = sand.u32 %s27, 1
        %s161 = smul.addr %s160, 32
        %s162 = scalar_lea.vmem [#allocation2], %s161
        %p163 = pneg %p40
        %p164 = pneg %p37
        %s165 = smul.u32 2, %s19
        %p166 = scmp.lt.s32.totalorder %s165, 3
        %s167 = scalar_select %p166, %s165, 3
        %s168 = smul.addr %s167, 8
        %s169 = scalar_lea.vmem %s1, %s168
        %p170 = pneg %p66
        %p171 = pneg %p63
        %p172 = pneg %p92
        %p173 = pneg %p89
        %s174 = sand.u32 %s79, 1
        %s175 = scalar_lea.sflag [#allocation4], %s174
        %s176 = sand.u32 %s79, 1
        %s177 = smul.addr %s176, 32
        %s178 = scalar_lea.vmem [#allocation5], %s177
        %s179 = smul.u32 2, %s19
        %s180 = smul.u32 2, %s19
        %p181 = scmp.lt.s32.totalorder %s180, 3
        %s182 = scalar_select %p181, %s180, 3
        %s183 = smul.addr %s182, 8
        %s184 = scalar_lea.vmem %s1, %s183
        %s185 = smul.u32 2, %s19
        %s186 = smul.u32 2, %s19
        %v187 = vld [vmem:[%s153] sm:$0xff]
        %v188 = vld [vmem:[%s153 + $0x8] sm:$0xff]
        %v189 = vld [vmem:[%s153 + $0x10] sm:$0xff]
        %v190 = vld [vmem:[%s153 + $0x18] sm:$0xff]
        %v191 = vadd.f32 %v187, %v188
        %192 = vadd.xlane.f32.xlu0 %v191
        %v193 = vpop.xlane.xlu0 %192
        %v194 = vadd.f32 %v189, %v190
        %195 = vadd.xlane.f32.xlu0 %v194
        %v196 = vpop.xlane.xlu0 %195
        %v197 = vrot.slane %v193, 4
        %v198 = vadd.f32 %v193, %v197
        %v199 = vrot.slane %v198, 2
        %v200 = vadd.f32 %v198, %v199
        %v201 = vrot.slane %v200, 1
        %v202 = vadd.f32 %v200, %v201
        %v203 = vrot.slane %v196, 4
        %v204 = vadd.f32 %v196, %v203
        %v205 = vrot.slane %v204, 2
        %v206 = vadd.f32 %v204, %v205
        %v207 = vrot.slane %v206, 1
        %v208 = vadd.f32 %v206, %v207
        %v209 = vmul.f32 %v187, %v187
        %v210 = vmul.f32 %v188, %v188
        %v211 = vmul.f32 %v189, %v189
        %v212 = vmul.f32 %v190, %v190
        %v213 = vadd.f32 %v209, %v210
        %214 = vadd.xlane.f32.xlu0 %v213
        %v215 = vpop.xlane.xlu0 %214
        %v216 = vadd.f32 %v211, %v212
        %217 = vadd.xlane.f32.xlu0 %v216
        %v218 = vpop.xlane.xlu0 %217
        %v219 = vrot.slane %v215, 4
        %v220 = vadd.f32 %v215, %v219
        %v221 = vrot.slane %v220, 2
        %v222 = vadd.f32 %v220, %v221
        %v223 = vrot.slane %v222, 1
        %v224 = vadd.f32 %v222, %v223
        %v225 = vrot.slane %v218, 4
        %v226 = vadd.f32 %v218, %v225
        %v227 = vrot.slane %v226, 2
        %v228 = vadd.f32 %v226, %v227
        %v229 = vrot.slane %v228, 1
        %v230 = vadd.f32 %v228, %v229
        %v231 = vmul.f32 %v202, 0.00048828125
        %v232 = vmul.f32 %v208, 0.00048828125
        %v233 = vmul.f32 %v224, 0.00048828125
        %v234 = vmul.f32 %v230, 0.00048828125
        %v235 = vmul.f32 %v231, %v231
        %v236 = vmul.f32 %v232, %v232
        %v237 = vsub.f32 %v233, %v235
        %v238 = vsub.f32 %v234, %v236
        %v239 = vmax.f32 %v237, 0.0
        %v240 = vmax.f32 %v238, 0.0
        %v241 = vadd.f32 %v239, 1e-05
        %v242 = vadd.f32 %v240, 1e-05
        %v243 = vrsqrt.pop %v241
        %v244 = vrsqrt.pop %v242
        %v245 = vld [vmem:[%s184] sm:$0xff]
        %v246 = vld [vmem:[%s184 + $0x8] sm:$0xff]
        %v247 = vmul.f32 %v243, %v245
        %v248 = vmul.f32 %v244, %v246
        %v249 = vmul.f32 %v231, %v247
        %v250 = vmul.f32 %v232, %v248
        %253 = vrot.lane.b32.xlu0 %v249, 1
        %v254 = vpop.permute.xlu0 %253
        %255 = vrot.lane.b32.xlu0 %v250, 1
        %v256 = vpop.permute.xlu0 %255
        %v259 = vsub.f32 %v245, %v254
        %v260 = vsub.f32 %v246, %v256
        %262 = vset.pattern.permute.xlu0 0
        %263 = vperm.xlu0 %262, %v247
        %v264 = vpop.permute.xlu0 %263
        %267 = vset.pattern.permute.xlu0 0
        %268 = vperm.xlu0 %267, %v248
        %v269 = vpop.permute.xlu0 %268
        %v271 = vmul.f32 %v187, %v264
        %v272 = vmul.f32 %v188, %v264
        %v273 = vmul.f32 %v189, %v269
        %v274 = vmul.f32 %v190, %v269
        %276 = vset.pattern.permute.xlu0 1
        %277 = vperm.xlu0 %276, %v259
        %v278 = vpop.permute.xlu0 %277
        %281 = vset.pattern.permute.xlu0 1
        %282 = vperm.xlu0 %281, %v260
        %v283 = vpop.permute.xlu0 %282
        %v285 = vadd.f32 %v271, %v278
        %v286 = vadd.f32 %v272, %v278
        %v287 = vadd.f32 %v273, %v283
        %v288 = vadd.f32 %v274, %v283
        %289 = vst [vmem:[%s178] sm:$0xff] %v285
        %290 = vst [vmem:[%s178 + $0x8] sm:$0xff] %v286
        %291 = vst [vmem:[%s178 + $0x10] sm:$0xff] %v287
        %292 = vst [vmem:[%s178 + $0x18] sm:$0xff] %v288
        %s293 = sand.u32 %s79, 1
        %s294 = scalar_lea.sflag [#allocation4], %s293
        %s295 = sand.u32 %s79, 1
        %s296 = smul.addr %s295, 32
        %s297 = scalar_lea.vmem [#allocation5], %s296
        // Predicated region
        $region33: #{tpu_custom_call.1} parent=27 // pred_check
          %p298 = pneg %p89
        $region34: #{tpu_custom_call.1} parent=27 // pred_check_branch
          %300 = sbr.rel (%p298) target = $region36
        $region35: #{tpu_custom_call.1} parent=27 // pred_region
          %s301 = smul.u32 2, %s19
          %s303 = ssub.s32 512, 512
          %304 = vsyncadd %s294, %s303
          %s305 = smul.addr %s301, 2
          %s306 = smul.addr %s305, 128
          %s307 = scalar_lea.hbm %s2, %s306
          %s308 = sshll.u32 %s297, 4
          %s309 = int_to_ptr.vmem [resolvable:$true] %s308
          %314 = dma.vmem_to_hbm [thread:$0]  %s309, 512, %s307, %s294, 256, 256, 16
        $region36: #{tpu_custom_call.1} parent=27 // pred_fallthru
          _
      $region28: #{tpu_custom_call.1} parent=5 // pred_fallthru
        _
      %p315 = scmp.le.s32.totalorder 2, %s14
      // Predicated region
      $region37: #{tpu_custom_call.1} parent=5 // pred_check
        %p316 = pneg %p315
      $region38: #{tpu_custom_call.1} parent=5 // pred_check_branch
        %318 = sbr.rel (%p316) target = $region40
      $region39: #{tpu_custom_call.1} parent=5 // pred_region
        %s319 = ssub.s32 %s14, 2
        // Predicated region
        $region41: #{tpu_custom_call.1} parent=39 // pred_check
          %p320 = pneg %p95
        $region42: #{tpu_custom_call.1} parent=39 // pred_check_branch
          %322 = sbr.rel (%p320) target = $region44
        $region43: #{tpu_custom_call.1} parent=39 // pred_region
          %s323 = sand.u32 %s80, 1
          %s324 = scalar_lea.sflag [#allocation4], %s323
          %s325 = sand.u32 %s80, 1
          %s326 = smul.addr %s325, 32
          %s327 = scalar_lea.vmem [#allocation5], %s326
          %328 = dma.done %s324, 512
        $region44: #{tpu_custom_call.1} parent=39 // pred_fallthru
          _
      $region40: #{tpu_custom_call.1} parent=5 // pred_fallthru
        _
    $region6: #{tpu_custom_call.1} parent=1 // loop_footer
      %s18 = sadd.s32 1, %s14
    $region7: #{tpu_custom_call.1} parent=1 // loop_footer_branch
      %13 = sbr.rel target = $region3
    $region8: #{tpu_custom_call.1} parent=1 // loop_exit
      _
    %329 = vsyncpa [#allocation3], 1
    %s330 = scalar_lea.sflag [#allocation3], 1
    %331 = vsyncpa %s330, 1
    %332 = vsyncpa [#allocation4], 1
    %s333 = scalar_lea.sflag [#allocation4], 1
    %334 = vsyncpa %s333, 1

</llo_original>
